<compile_context>
chip_gen: v7x
topology: tpu7x:2x2x1
jax: 0.10.0
libtpu: 0.0.40
codegen_flags: <defaults>
</compile_context>

<pallas_src>
import functools

import jax
import jax.numpy as jnp
from jax.experimental import pallas as pl
from jax.experimental.pallas import tpu as pltpu


# ----------------------------------------------------------------------------
# Small helpers
# ----------------------------------------------------------------------------
def _pow(x, p):
    """x**p with cheap VPU paths for the common small integer exponents."""
    p = float(p)
    if p == 1.0:
        return x
    if p == 2.0:
        return x * x
    if p == 3.0:
        return x * x * x
    if p == float(int(p)) and p > 0.0:
        return x ** int(p)
    return x ** p  # general (possibly fractional) exponent; NaN for x<0, same as torch


def _pick_tile(dim, candidates):
    for c in candidates:
        if c <= dim and dim % c == 0:
            return c
    return dim


def _vmem_budgets():
    """(vmem_limit_bytes, single_shot_budget_bytes, is_small_vmem_chip)."""
    phys = 64 * 1024 * 1024  # conservative default == v7x per-TC VMEM
    try:
        phys = int(pltpu.get_tpu_info().vmem_capacity_bytes)
    except Exception:
        pass
    if phys <= 64 * 1024 * 1024:
        # v7x: 64 MiB physical per TensorCore -> stay well below it.
        return 48 * 1024 * 1024, 28 * 1024 * 1024, True
    # v5e / v6e: 128 MiB physical VMEM.
    return 100 * 1024 * 1024, 64 * 1024 * 1024, False


def _a_spec_buffered(block_shape, index_map):
    """A-tile BlockSpec with 3-deep buffering when the API supports it."""
    try:
        return pl.BlockSpec(block_shape, index_map, pipeline_mode=pl.Buffered(3))
    except Exception:
        return pl.BlockSpec(block_shape, index_map)


# ----------------------------------------------------------------------------
# Kernels
# ----------------------------------------------------------------------------
def _hill_kernel(x_ref, o_ref, *, h_exp):
    """One elementwise pass: hill(x) = x^h / (x^h + 1), output bf16."""
    xh = _pow(x_ref[...].astype(jnp.float32), h_exp)
    o_ref[...] = (xh * pl.reciprocal(xh + 1.0, approx=True)).astype(o_ref.dtype)


def _gd_single_kernel(a_ref, hill_ref, xi_ref, o_ref, *, b, f_exp):
    """Single-shot (full-K) block:  o = -b*xi^f + A_row_panel @ hill."""
    a = a_ref[...]
    if a.dtype != jnp.bfloat16:           # static dtype check: cast f32 A per-tile
        a = a.astype(jnp.bfloat16)
    acc = jnp.dot(a, hill_ref[...], preferred_element_type=jnp.float32)
    decay = -b * _pow(xi_ref[...].astype(jnp.float32), f_exp)
    o_ref[...] = (acc + decay).astype(o_ref.dtype)


def _gd_tiled_kernel(a_ref, hill_ref, xi_ref, o_ref, acc_ref, *, b, f_exp):
    """One (i, j, k) reduction step of  -b*x^f + A @ hill."""
    k = pl.program_id(2)

    @pl.when(k == 0)
    def _():
        # Init accumulator with the decay term (no zero-fill, no epilogue add).
        acc_ref[...] = -b * _pow(xi_ref[...].astype(jnp.float32), f_exp)

    a = a_ref[...]
    if a.dtype != jnp.bfloat16:
        a = a.astype(jnp.bfloat16)
    acc_ref[...] += jnp.dot(a, hill_ref[...], preferred_element_type=jnp.float32)

    @pl.when(k == pl.num_programs(2) - 1)
    def _():
        o_ref[...] = acc_ref[...].astype(o_ref.dtype)


# ----------------------------------------------------------------------------
# Wrappers
# ----------------------------------------------------------------------------
def _hill_precompute(x, h_exp):
    """One-pass Pallas kernel producing bf16 hill(x); x is (N, Dp), Dp % 128 == 0."""
    N, Dp = x.shape
    br = _pick_tile(N, (1024, 512, 256, 128, 64, 32, 16, 8))
    return pl.pallas_call(
        functools.partial(_hill_kernel, h_exp=float(h_exp)),
        out_shape=jax.ShapeDtypeStruct((N, Dp), jnp.bfloat16),
        grid_spec=pltpu.PrefetchScalarGridSpec(
            num_scalar_prefetch=0,
            grid=(N // br,),
            in_specs=[pl.BlockSpec((br, Dp), lambda i: (i, 0))],
            out_specs=pl.BlockSpec((br, Dp), lambda i: (i, 0)),
        ),
        compiler_params=pltpu.CompilerParams(dimension_semantics=("parallel",)),
    )(x)


def gene_dynamics(A, x, b, f_exp=1, h_exp=2, *, tm=None, tn=None, tk=None):
    """dx/dt = -b * x**f_exp + A @ (x**h_exp / (x**h_exp + 1)).

    Pass A already cast to bf16 (and cached across ODE steps) for the lowest
    HBM traffic; an f32 A is streamed as-is and cast per-tile in-kernel.
    """
    N, N2 = A.shape
    assert N == N2, "A must be square"
    Nx, D = x.shape
    assert Nx == N, "x row count must match A"

    vmem_limit, single_budget, small_vmem = _vmem_budgets()

    # Pad D to a multiple of 128 so output stores are lane-dense; slice after.
    Dp = ((D + 127) // 128) * 128
    xp = x if Dp == D else jnp.pad(x, ((0, 0), (0, Dp - D)))

    # Precompute the bf16 MXU operand once (removes redundant per-block hill
    # recompute and halves the streamed x bytes).
    hill = _hill_precompute(xp, h_exp)

    a_item = jnp.dtype(A.dtype).itemsize
    x_item = jnp.dtype(x.dtype).itemsize
    out_item = x_item
    a_is_bf16 = (A.dtype == jnp.bfloat16)

    # ---- tile selection -----------------------------------------------------
    if tm is None:
        tm = _pick_tile(N, (512, 256, 128, 64, 32, 16, 8))
        # v7x has 2 TensorCores: keep >= 2 blocks on the parallel i axis.
        if small_vmem and N // tm < 2 and tm % 16 == 0:
            tm //= 2
    assert N % tm == 0, "tm must divide N"

    if tn is not None:
        assert Dp % tn == 0 and tn % 128 == 0, "tn must divide padded D and be a multiple of 128"
        tn_candidates = (tn,)
    else:
        tn_candidates = tuple(
            c for c in (Dp, 2048, 1024, 512, 256, 128) if c <= Dp and Dp % c == 0
        )

    kernel_kwargs = dict(b=float(b), f_exp=float(f_exp))
    out_shape = jax.ShapeDtypeStruct((N, Dp), x.dtype)

    # ---- single-shot (full-K resident) path ---------------------------------
    def single_shot_bytes(tn_):
        a_panel = 2 * tm * N * a_item                    # double-buffered A row panel
        a_cast = 0 if a_is_bf16 else tm * N * 2          # in-kernel bf16 cast temp
        hill_p = 2 * N * tn_ * 2                         # bf16 hill column panel
        xi_t = 2 * tm * tn_ * x_item                     # decay x tile
        out_t = 2 * tm * tn_ * out_item
        temps = 2 * tm * tn_ * 4                         # f32 dot result + decay temp
        return a_panel + a_cast + hill_p + xi_t + out_t + temps

    if tk is None:
        for tn_s in tn_candidates:
            if single_shot_bytes(tn_s) <= single_budget:
                grid = (N // tm, Dp // tn_s)
                out = pl.pallas_call(
                    functools.partial(_gd_single_kernel, **kernel_kwargs),
                    out_shape=out_shape,
                    grid_spec=pltpu.PrefetchScalarGridSpec(
                        num_scalar_prefetch=0,
                        grid=grid,
                        in_specs=[
                            pl.BlockSpec((tm, N), lambda i, j: (i, 0)),     # A row panel
                            pl.BlockSpec((N, tn_s), lambda i, j: (0, j)),   # bf16 hill panel
                            pl.BlockSpec((tm, tn_s), lambda i, j: (i, j)),  # x for decay
                        ],
                        out_specs=pl.BlockSpec((tm, tn_s), lambda i, j: (i, j)),
                    ),
                    compiler_params=pltpu.CompilerParams(
                        dimension_semantics=("parallel", "parallel"),
                        vmem_limit_bytes=vmem_limit,
                    ),
                )(A, hill, xp)
                return out if Dp == D else out[:, :D]

    # ---- tiled-K fallback ----------------------------------------------------
    if tk is None:
        tk = _pick_tile(N, (512, 256, 128))
    assert N % tk == 0, "tk must divide N"

    def tiled_bytes(tn_):
        a_tiles = 3 * tm * tk * a_item                   # Buffered(3) A tiles
        a_cast = 0 if a_is_bf16 else tm * tk * 2
        hill_t = 2 * tk * tn_ * 2
        xi_t = 2 * tm * tn_ * x_item
        out_t = 2 * tm * tn_ * out_item
        acc = tm * tn_ * 4
        temps = tm * tn_ * 4
        return a_tiles + a_cast + hill_t + xi_t + out_t + acc + temps

    # Prefer tn = Dp so the A tile is streamed exactly once across the reduction.
    tn_sel = tn_candidates[-1]
    for cand in tn_candidates:
        if tiled_bytes(cand) <= int(0.7 * vmem_limit):
            tn_sel = cand
            break

    grid = (N // tm, Dp // tn_sel, N // tk)
    out = pl.pallas_call(
        functools.partial(_gd_tiled_kernel, **kernel_kwargs),
        out_shape=out_shape,
        grid_spec=pltpu.PrefetchScalarGridSpec(
            num_scalar_prefetch=0,
            grid=grid,
            in_specs=[
                _a_spec_buffered((tm, tk), lambda i, j, k: (i, k)),      # A tile
                pl.BlockSpec((tk, tn_sel), lambda i, j, k: (k, j)),      # bf16 hill tile
                pl.BlockSpec((tm, tn_sel), lambda i, j, k: (i, j)),      # x for decay
            ],
            out_specs=pl.BlockSpec((tm, tn_sel), lambda i, j, k: (i, j)),
            scratch_shapes=[pltpu.VMEM((tm, tn_sel), jnp.float32)],
        ),
        compiler_params=pltpu.CompilerParams(
            dimension_semantics=("parallel", "parallel", "arbitrary"),
            vmem_limit_bytes=vmem_limit,
        ),
    )(A, hill, xp)
    return out if Dp == D else out[:, :D]


def gene_dynamics_ref(A, x, b, f_exp=1, h_exp=2):
    xh = x ** h_exp
    return -b * (x ** f_exp) + A.astype(jnp.float32) @ (xh / (xh + 1.0))


# ----------------------------------------------------------------------------
# Demo / self-test
# ----------------------------------------------------------------------------
if __name__ == "__main__":
    key = jax.random.PRNGKey(0)
    kA, kx = jax.random.split(key)

    # Small shapes consistent with the module: A is (N, N), x is (N, D).
    N, D = 256, 128
    b = 1.0
    f_exp, h_exp = 1, 2

    A = jax.random.normal(kA, (N, N), dtype=jnp.float32) * 0.1
    x = jax.random.uniform(kx, (N, D), dtype=jnp.float32)

    ref = gene_dynamics_ref(A, x, b, f_exp, h_exp)

    # Single-shot path, f32 A streamed and cast per-tile in-kernel.
    out = jax.block_until_ready(gene_dynamics(A, x, b, f_exp, h_exp))
    assert out.shape == (N, D)
    # bf16 MXU operands + approx EUP reciprocal -> loosened tolerance vs f32 ref.
    assert jnp.allclose(out, ref, atol=5e-2, rtol=5e-2), (
        f"single-shot max err {jnp.max(jnp.abs(out - ref))}"
    )

    # Tiled-K fallback (forced small tiles), with a cached bf16 A as a caller
    # would reuse across ODE steps.
    A_bf16 = A.astype(jnp.bfloat16)
    out_tiled = jax.block_until_ready(
        gene_dynamics(A_bf16, x, b, f_exp, h_exp, tm=128, tn=128, tk=128)
    )
    assert out_tiled.shape == (N, D)
    assert jnp.allclose(out_tiled, ref, atol=5e-2, rtol=5e-2), (
        f"tiled max err {jnp.max(jnp.abs(out_tiled - ref))}"
    )

    print("KERNEL_OK")
</pallas_src>

<mosaic_0001>
module attributes {stable_mosaic.version = 11 : i64} {
  func.func @_hill_kernel(%arg0: i32, %arg1: memref<256x128xf32, #tpu.memory_space<vmem>>, %arg2: memref<256x128xbf16, #tpu.memory_space<vmem>>) attributes {dimension_semantics = [#tpu.dimension_semantics<parallel>], iteration_bounds = array<i64: 1>, scalar_prefetch = 0 : i64, scratch_operands = 0 : i64, tpu.core_type = #tpu.core_type<tc>, window_params = [{transform_indices = @transform_0, window_bounds = array<i64: 256, 128>}, {transform_indices = @transform_1, window_bounds = array<i64: 256, 128>}]} {
    %c0 = arith.constant 0 : index
    %c0_0 = arith.constant 0 : index
    %0 = vector.load %arg1[%c0, %c0_0] : memref<256x128xf32, #tpu.memory_space<vmem>>, vector<256x128xf32>
    %1 = arith.mulf %0, %0 : vector<256x128xf32>
    %cst = arith.constant 1.000000e+00 : f32
    %2 = vector.broadcast %cst : f32 to vector<256x128xf32>
    %3 = arith.addf %1, %2 : vector<256x128xf32>
    %4 = tpu.reciprocal %3 {approx = true} : vector<256x128xf32> -> vector<256x128xf32>
    %5 = arith.mulf %1, %4 : vector<256x128xf32>
    %6 = arith.truncf %5 : vector<256x128xf32> to vector<256x128xbf16>
    %c0_1 = arith.constant 0 : index
    %c0_2 = arith.constant 0 : index
    %7 = vector.load %arg2[%c0_1, %c0_2] : memref<256x128xbf16, #tpu.memory_space<vmem>>, vector<256x128xbf16>
    tpu.vector_store %arg2[%c0_1, %c0_2], %6 {strides = array<i32>} : memref<256x128xbf16, #tpu.memory_space<vmem>>, vector<256x128xbf16>,
    return
  }
  func.func @transform_0(%arg0: i32) -> (i32, i32) {
    %c0_i32 = arith.constant 0 : i32
    %c0_i32_0 = arith.constant 0 : i32
    return %arg0, %c0_i32 : i32, i32
  }
  func.func @transform_1(%arg0: i32) -> (i32, i32) {
    %c0_i32 = arith.constant 0 : i32
    %c0_i32_0 = arith.constant 0 : i32
    return %arg0, %c0_i32 : i32, i32
  }
}

</mosaic_0001>

<llo_original>
// kernel: tpu_custom_call.1
$region0: #{tpu_custom_call.1}
  #allocation0 [shape = 'u32[]', space=smem, size = 0x4, offset = 0x4, fixed_abs, tag = 'smem constant byte address 0x4 - core index']
  #allocation1 [shape = 'u32[144,128]{1,0:T(1,128)}', space=vmem, size = 0x12000, scoped, tag = 'internal scratch']
  %s0 = inlined_call_operand.hbm [shape: f32[256,128], index: 0, kind: input, shape index: {}]
  %s1 = inlined_call_operand.hbm [shape: bf16[256,128], index: 1, kind: output, shape index: {}]
  %s2 = sld [smem:[#allocation0]]
  $region18: #{tpu_custom_call.1} parent=0
    _
  %s4 = ssub.s32 1, %s2
  %s5 = scalar_select 0, %s4, %s2
  $region1: #{tpu_custom_call.1} parent=0
    #allocation2 [shape = 'u8[131072]{0}', space=vmem, size = 0x20000, scoped, tag = 'input window, operand 0, single buffered']
    #allocation3 [shape = 's32[1]{0}', space=sflag, size = 0x4, scoped, tag = 'scoped memory for tpu_custom_call.1']
    #allocation4 [shape = 's32[1]{0}', space=sflag, size = 0x4, scoped, tag = 'scoped memory for tpu_custom_call.1']
    #allocation5 [shape = 'u8[65536]{0}', space=vmem, size = 0x10000, scoped, tag = 'output window, operand 0, single buffered']
    %6 = vsyncpa [#allocation3], 0
    %7 = vsyncpa [#allocation4], 0
    // Predicated region
    $region2: #{tpu_custom_call.1} parent=1 // pred_check
      _
    $region3: #{tpu_custom_call.1} parent=1 // pred_check_branch
      %9 = sbr.rel (0) target = $region5
    $region4: #{tpu_custom_call.1} parent=1 // pred_region
      %s11 = ssub.s32 4096, 4096
      %12 = vsyncadd [#allocation3], %s11
      %s13 = sshll.u32 [#allocation2], 4
      %s14 = int_to_ptr.vmem [resolvable:$true] %s13
      %19 = dma.hbm_to_vmem [thread:$0]  %s0, 4096, %s14, [#allocation3], 128, 128, 8
    $region5: #{tpu_custom_call.1} parent=1 // pred_fallthru
      _
    // Predicated region
    $region6: #{tpu_custom_call.1} parent=1 // pred_check
      _
    $region7: #{tpu_custom_call.1} parent=1 // pred_check_branch
      %21 = sbr.rel (0) target = $region9
    $region8: #{tpu_custom_call.1} parent=1 // pred_region
      %22 = dma.done [#allocation3], 4096
    $region9: #{tpu_custom_call.1} parent=1 // pred_fallthru
      _
    %v23 = vld [vmem:[#allocation2] sm:$0xff]
    %v24 = vld [vmem:[#allocation2 + $0x8] sm:$0xff]
    %v25 = vld [vmem:[#allocation2 + $0x10] sm:$0xff]
    %v26 = vld [vmem:[#allocation2 + $0x18] sm:$0xff]
    %v27 = vld [vmem:[#allocation2 + $0x20] sm:$0xff]
    %v28 = vld [vmem:[#allocation2 + $0x28] sm:$0xff]
    %v29 = vld [vmem:[#allocation2 + $0x30] sm:$0xff]
    %v30 = vld [vmem:[#allocation2 + $0x38] sm:$0xff]
    %v31 = vld [vmem:[#allocation2 + $0x40] sm:$0xff]
    %v32 = vld [vmem:[#allocation2 + $0x48] sm:$0xff]
    %v33 = vld [vmem:[#allocation2 + $0x50] sm:$0xff]
    %v34 = vld [vmem:[#allocation2 + $0x58] sm:$0xff]
    %v35 = vld [vmem:[#allocation2 + $0x60] sm:$0xff]
    %v36 = vld [vmem:[#allocation2 + $0x68] sm:$0xff]
    %v37 = vld [vmem:[#allocation2 + $0x70] sm:$0xff]
    %v38 = vld [vmem:[#allocation2 + $0x78] sm:$0xff]
    %v39 = vld [vmem:[#allocation2 + $0x80] sm:$0xff]
    %v40 = vld [vmem:[#allocation2 + $0x88] sm:$0xff]
    %v41 = vld [vmem:[#allocation2 + $0x90] sm:$0xff]
    %v42 = vld [vmem:[#allocation2 + $0x98] sm:$0xff]
    %v43 = vld [vmem:[#allocation2 + $0xa0] sm:$0xff]
    %v44 = vld [vmem:[#allocation2 + $0xa8] sm:$0xff]
    %v45 = vld [vmem:[#allocation2 + $0xb0] sm:$0xff]
    %v46 = vld [vmem:[#allocation2 + $0xb8] sm:$0xff]
    %v47 = vld [vmem:[#allocation2 + $0xc0] sm:$0xff]
    %v48 = vld [vmem:[#allocation2 + $0xc8] sm:$0xff]
    %v49 = vld [vmem:[#allocation2 + $0xd0] sm:$0xff]
    %v50 = vld [vmem:[#allocation2 + $0xd8] sm:$0xff]
    %v51 = vld [vmem:[#allocation2 + $0xe0] sm:$0xff]
    %v52 = vld [vmem:[#allocation2 + $0xe8] sm:$0xff]
    %v53 = vld [vmem:[#allocation2 + $0xf0] sm:$0xff]
    %v54 = vld [vmem:[#allocation2 + $0xf8] sm:$0xff]
    %v55 = vmul.f32 %v23, %v23
    %v56 = vmul.f32 %v24, %v24
    %v57 = vmul.f32 %v25, %v25
    %v58 = vmul.f32 %v26, %v26
    %v59 = vmul.f32 %v27, %v27
    %v60 = vmul.f32 %v28, %v28
    %v61 = vmul.f32 %v29, %v29
    %v62 = vmul.f32 %v30, %v30
    %v63 = vmul.f32 %v31, %v31
    %v64 = vmul.f32 %v32, %v32
    %v65 = vmul.f32 %v33, %v33
    %v66 = vmul.f32 %v34, %v34
    %v67 = vmul.f32 %v35, %v35
    %v68 = vmul.f32 %v36, %v36
    %v69 = vmul.f32 %v37, %v37
    %v70 = vmul.f32 %v38, %v38
    %v71 = vmul.f32 %v39, %v39
    %v72 = vmul.f32 %v40, %v40
    %v73 = vmul.f32 %v41, %v41
    %v74 = vmul.f32 %v42, %v42
    %v75 = vmul.f32 %v43, %v43
    %v76 = vmul.f32 %v44, %v44
    %v77 = vmul.f32 %v45, %v45
    %v78 = vmul.f32 %v46, %v46
    %v79 = vmul.f32 %v47, %v47
    %v80 = vmul.f32 %v48, %v48
    %v81 = vmul.f32 %v49, %v49
    %v82 = vmul.f32 %v50, %v50
    %v83 = vmul.f32 %v51, %v51
    %v84 = vmul.f32 %v52, %v52
    %v85 = vmul.f32 %v53, %v53
    %v86 = vmul.f32 %v54, %v54
    %v87 = vadd.f32 %v55, 1.0
    %v88 = vadd.f32 %v56, 1.0
    %v89 = vadd.f32 %v57, 1.0
    %v90 = vadd.f32 %v58, 1.0
    %v91 = vadd.f32 %v59, 1.0
    %v92 = vadd.f32 %v60, 1.0
    %v93 = vadd.f32 %v61, 1.0
    %v94 = vadd.f32 %v62, 1.0
    %v95 = vadd.f32 %v63, 1.0
    %v96 = vadd.f32 %v64, 1.0
    %v97 = vadd.f32 %v65, 1.0
    %v98 = vadd.f32 %v66, 1.0
    %v99 = vadd.f32 %v67, 1.0
    %v100 = vadd.f32 %v68, 1.0
    %v101 = vadd.f32 %v69, 1.0
    %v102 = vadd.f32 %v70, 1.0
    %v103 = vadd.f32 %v71, 1.0
    %v104 = vadd.f32 %v72, 1.0
    %v105 = vadd.f32 %v73, 1.0
    %v106 = vadd.f32 %v74, 1.0
    %v107 = vadd.f32 %v75, 1.0
    %v108 = vadd.f32 %v76, 1.0
    %v109 = vadd.f32 %v77, 1.0
    %v110 = vadd.f32 %v78, 1.0
    %v111 = vadd.f32 %v79, 1.0
    %v112 = vadd.f32 %v80, 1.0
    %v113 = vadd.f32 %v81, 1.0
    %v114 = vadd.f32 %v82, 1.0
    %v115 = vadd.f32 %v83, 1.0
    %v116 = vadd.f32 %v84, 1.0
    %v117 = vadd.f32 %v85, 1.0
    %v118 = vadd.f32 %v86, 1.0
    %v119 = vrcp.pop %v87
    %v120 = vrcp.pop %v88
    %v121 = vrcp.pop %v89
    %v122 = vrcp.pop %v90
    %v123 = vrcp.pop %v91
    %v124 = vrcp.pop %v92
    %v125 = vrcp.pop %v93
    %v126 = vrcp.pop %v94
    %v127 = vrcp.pop %v95
    %v128 = vrcp.pop %v96
    %v129 = vrcp.pop %v97
    %v130 = vrcp.pop %v98
    %v131 = vrcp.pop %v99
    %v132 = vrcp.pop %v100
    %v133 = vrcp.pop %v101
    %v134 = vrcp.pop %v102
    %v135 = vrcp.pop %v103
    %v136 = vrcp.pop %v104
    %v137 = vrcp.pop %v105
    %v138 = vrcp.pop %v106
    %v139 = vrcp.pop %v107
    %v140 = vrcp.pop %v108
    %v141 = vrcp.pop %v109
    %v142 = vrcp.pop %v110
    %v143 = vrcp.pop %v111
    %v144 = vrcp.pop %v112
    %v145 = vrcp.pop %v113
    %v146 = vrcp.pop %v114
    %v147 = vrcp.pop %v115
    %v148 = vrcp.pop %v116
    %v149 = vrcp.pop %v117
    %v150 = vrcp.pop %v118
    %v151 = vmul.f32 %v55, %v119
    %v152 = vmul.f32 %v56, %v120
    %v153 = vmul.f32 %v57, %v121
    %v154 = vmul.f32 %v58, %v122
    %v155 = vmul.f32 %v59, %v123
    %v156 = vmul.f32 %v60, %v124
    %v157 = vmul.f32 %v61, %v125
    %v158 = vmul.f32 %v62, %v126
    %v159 = vmul.f32 %v63, %v127
    %v160 = vmul.f32 %v64, %v128
    %v161 = vmul.f32 %v65, %v129
    %v162 = vmul.f32 %v66, %v130
    %v163 = vmul.f32 %v67, %v131
    %v164 = vmul.f32 %v68, %v132
    %v165 = vmul.f32 %v69, %v133
    %v166 = vmul.f32 %v70, %v134
    %v167 = vmul.f32 %v71, %v135
    %v168 = vmul.f32 %v72, %v136
    %v169 = vmul.f32 %v73, %v137
    %v170 = vmul.f32 %v74, %v138
    %v171 = vmul.f32 %v75, %v139
    %v172 = vmul.f32 %v76, %v140
    %v173 = vmul.f32 %v77, %v141
    %v174 = vmul.f32 %v78, %v142
    %v175 = vmul.f32 %v79, %v143
    %v176 = vmul.f32 %v80, %v144
    %v177 = vmul.f32 %v81, %v145
    %v178 = vmul.f32 %v82, %v146
    %v179 = vmul.f32 %v83, %v147
    %v180 = vmul.f32 %v84, %v148
    %v181 = vmul.f32 %v85, %v149
    %v182 = vmul.f32 %v86, %v150
    %v183 = vpack.c.bf16 %v152, %v151
    %v184 = vpack.c.bf16 %v154, %v153
    %v185 = vpack.c.bf16 %v156, %v155
    %v186 = vpack.c.bf16 %v158, %v157
    %v187 = vpack.c.bf16 %v160, %v159
    %v188 = vpack.c.bf16 %v162, %v161
    %v189 = vpack.c.bf16 %v164, %v163
    %v190 = vpack.c.bf16 %v166, %v165
    %v191 = vpack.c.bf16 %v168, %v167
    %v192 = vpack.c.bf16 %v170, %v169
    %v193 = vpack.c.bf16 %v172, %v171
    %v194 = vpack.c.bf16 %v174, %v173
    %v195 = vpack.c.bf16 %v176, %v175
    %v196 = vpack.c.bf16 %v178, %v177
    %v197 = vpack.c.bf16 %v180, %v179
    %v198 = vpack.c.bf16 %v182, %v181
    %v215 = vunpack.c.l.b16 %v183
    %v216 = vunpack.c.h.b16 %v183
    %v217 = vunpack.c.l.b16 %v184
    %v218 = vunpack.c.h.b16 %v184
    %v219 = vunpack.c.l.b16 %v185
    %v220 = vunpack.c.h.b16 %v185
    %v221 = vunpack.c.l.b16 %v186
    %v222 = vunpack.c.h.b16 %v186
    %v223 = vunpack.c.l.b16 %v187
    %v224 = vunpack.c.h.b16 %v187
    %v225 = vunpack.c.l.b16 %v188
    %v226 = vunpack.c.h.b16 %v188
    %v227 = vunpack.c.l.b16 %v189
    %v228 = vunpack.c.h.b16 %v189
    %v229 = vunpack.c.l.b16 %v190
    %v230 = vunpack.c.h.b16 %v190
    %v231 = vunpack.c.l.b16 %v191
    %v232 = vunpack.c.h.b16 %v191
    %v233 = vunpack.c.l.b16 %v192
    %v234 = vunpack.c.h.b16 %v192
    %v235 = vunpack.c.l.b16 %v193
    %v236 = vunpack.c.h.b16 %v193
    %v237 = vunpack.c.l.b16 %v194
    %v238 = vunpack.c.h.b16 %v194
    %v239 = vunpack.c.l.b16 %v195
    %v240 = vunpack.c.h.b16 %v195
    %v241 = vunpack.c.l.b16 %v196
    %v242 = vunpack.c.h.b16 %v196
    %v243 = vunpack.c.l.b16 %v197
    %v244 = vunpack.c.h.b16 %v197
    %v245 = vunpack.c.l.b16 %v198
    %v246 = vunpack.c.h.b16 %v198
    %v247 = vpack.c.b16 %v215, %v215
    %v248 = vpack.c.b16 %v216, %v216
    %v249 = vpack.c.b16 %v217, %v217
    %v250 = vpack.c.b16 %v218, %v218
    %v251 = vpack.c.b16 %v219, %v219
    %v252 = vpack.c.b16 %v220, %v220
    %v253 = vpack.c.b16 %v221, %v221
    %v254 = vpack.c.b16 %v222, %v222
    %v255 = vpack.c.b16 %v223, %v223
    %v256 = vpack.c.b16 %v224, %v224
    %v257 = vpack.c.b16 %v225, %v225
    %v258 = vpack.c.b16 %v226, %v226
    %v259 = vpack.c.b16 %v227, %v227
    %v260 = vpack.c.b16 %v228, %v228
    %v261 = vpack.c.b16 %v229, %v229
    %v262 = vpack.c.b16 %v230, %v230
    %v263 = vpack.c.b16 %v231, %v231
    %v264 = vpack.c.b16 %v232, %v232
    %v265 = vpack.c.b16 %v233, %v233
    %v266 = vpack.c.b16 %v234, %v234
    %v267 = vpack.c.b16 %v235, %v235
    %v268 = vpack.c.b16 %v236, %v236
    %v269 = vpack.c.b16 %v237, %v237
    %v270 = vpack.c.b16 %v238, %v238
    %v271 = vpack.c.b16 %v239, %v239
    %v272 = vpack.c.b16 %v240, %v240
    %v273 = vpack.c.b16 %v241, %v241
    %v274 = vpack.c.b16 %v242, %v242
    %v275 = vpack.c.b16 %v243, %v243
    %v276 = vpack.c.b16 %v244, %v244
    %v277 = vpack.c.b16 %v245, %v245
    %v278 = vpack.c.b16 %v246, %v246
    %311 = vst [vmem:[#allocation5] sm:$0xf] %v247
    %312 = vst [vmem:[#allocation5 + $0x4] sm:$0xf] %v248
    %313 = vst [vmem:[#allocation5 + $0x8] sm:$0xf] %v249
    %314 = vst [vmem:[#allocation5 + $0xc] sm:$0xf] %v250
    %315 = vst [vmem:[#allocation5 + $0x10] sm:$0xf] %v251
    %316 = vst [vmem:[#allocation5 + $0x14] sm:$0xf] %v252
    %317 = vst [vmem:[#allocation5 + $0x18] sm:$0xf] %v253
    %318 = vst [vmem:[#allocation5 + $0x1c] sm:$0xf] %v254
    %319 = vst [vmem:[#allocation5 + $0x20] sm:$0xf] %v255
    %320 = vst [vmem:[#allocation5 + $0x24] sm:$0xf] %v256
    %321 = vst [vmem:[#allocation5 + $0x28] sm:$0xf] %v257
    %322 = vst [vmem:[#allocation5 + $0x2c] sm:$0xf] %v258
    %323 = vst [vmem:[#allocation5 + $0x30] sm:$0xf] %v259
    %324 = vst [vmem:[#allocation5 + $0x34] sm:$0xf] %v260
    %325 = vst [vmem:[#allocation5 + $0x38] sm:$0xf] %v261
    %326 = vst [vmem:[#allocation5 + $0x3c] sm:$0xf] %v262
    %327 = vst [vmem:[#allocation5 + $0x40] sm:$0xf] %v263
    %328 = vst [vmem:[#allocation5 + $0x44] sm:$0xf] %v264
    %329 = vst [vmem:[#allocation5 + $0x48] sm:$0xf] %v265
    %330 = vst [vmem:[#allocation5 + $0x4c] sm:$0xf] %v266
    %331 = vst [vmem:[#allocation5 + $0x50] sm:$0xf] %v267
    %332 = vst [vmem:[#allocation5 + $0x54] sm:$0xf] %v268
    %333 = vst [vmem:[#allocation5 + $0x58] sm:$0xf] %v269
    %334 = vst [vmem:[#allocation5 + $0x5c] sm:$0xf] %v270
    %335 = vst [vmem:[#allocation5 + $0x60] sm:$0xf] %v271
    %336 = vst [vmem:[#allocation5 + $0x64] sm:$0xf] %v272
    %337 = vst [vmem:[#allocation5 + $0x68] sm:$0xf] %v273
    %338 = vst [vmem:[#allocation5 + $0x6c] sm:$0xf] %v274
    %339 = vst [vmem:[#allocation5 + $0x70] sm:$0xf] %v275
    %340 = vst [vmem:[#allocation5 + $0x74] sm:$0xf] %v276
    %341 = vst [vmem:[#allocation5 + $0x78] sm:$0xf] %v277
    %342 = vst [vmem:[#allocation5 + $0x7c] sm:$0xf] %v278
    // Predicated region
    $region10: #{tpu_custom_call.1} parent=1 // pred_check
      _
    $region11: #{tpu_custom_call.1} parent=1 // pred_check_branch
      %344 = sbr.rel (0) target = $region13
    $region12: #{tpu_custom_call.1} parent=1 // pred_region
      %s346 = ssub.s32 2048, 2048
      %347 = vsyncadd [#allocation4], %s346
      %s348 = sshll.u32 [#allocation5], 4
      %s349 = int_to_ptr.vmem [resolvable:$true] %s348
      %354 = dma.vmem_to_hbm [thread:$0]  %s349, 2048, %s1, [#allocation4], 64, 64, 4
    $region13: #{tpu_custom_call.1} parent=1 // pred_fallthru
      _
    // Predicated region
    $region14: #{tpu_custom_call.1} parent=1 // pred_check
      _
    $region15: #{tpu_custom_call.1} parent=1 // pred_check_branch
      %356 = sbr.rel (0) target = $region17
    $region16: #{tpu_custom_call.1} parent=1 // pred_region
      %357 = dma.done [#allocation4], 2048
    $region17: #{tpu_custom_call.1} parent=1 // pred_fallthru
      _
    %358 = vsyncpa [#allocation3], 1
    %359 = vsyncpa [#allocation4], 1

</llo_original>
